<compile_context>
chip_gen: v5e
topology: v5e:2x2
jax: 0.10.0
libtpu: 0.0.40
codegen_flags: <defaults>
</compile_context>

<pallas_src>
import jax
import jax.numpy as jnp
import numpy as np
from jax import lax
from jax.experimental import pallas as pl
from jax.experimental.pallas import tpu as pltpu


def _make_se_cam_kernel(bt):
    """Kernel factory: one grid step processes a (bt, C, N) batch tile."""

    def kernel(x_ref, w1t_ref, b1_ref, w2_ref, b2_ref, gamma_ref, out_ref):
        gamma = gamma_ref[0, 0]              # scalar (SMEM)
        w1t = w1t_ref[...]                   # (C, R)
        b1 = b1_ref[...]                     # (1, R)
        w2 = w2_ref[...]                     # (C, R)
        b2 = b2_ref[...]                     # (C, 1)

        # Static unroll over the batch tile (bt is small; per-slice ops are 2-D and identical
        # to the previously validated single-batch kernel).
        for b in range(bt):
            x = x_ref[b]                                              # (C, N) f32

            # ---- CAM branch: channel-channel attention ------------------------------
            # energy[i, j] = sum_n x[i, n] * x[j, n]  (x @ x.T as one NT matmul on the MXU)
            energy = lax.dot_general(
                x, x, dimension_numbers=(((1,), (1,)), ((), ())),
                preferred_element_type=jnp.float32)                   # (C, C)
            # softmax(row_max - energy) == softmax(-energy); stabilize with the row min so
            # the exponent is always <= 0.  Do NOT normalize p here -- fold 1/l into the
            # epilogue scale below.
            row_min = jnp.min(energy, axis=-1, keepdims=True)         # (C, 1)
            p = jnp.exp(row_min - energy)                             # (C, C), rowwise max = 1
            l = jnp.sum(p, axis=-1, keepdims=True)                    # (C, 1) softmax denom
            acc = jnp.dot(p, x, preferred_element_type=jnp.float32)   # (C, N) unnormalized CAM

            # ---- SE branch: GAP -> 1x1 conv -> ReLU -> 1x1 conv -> Sigmoid ----------
            gap = jnp.mean(x, axis=1, keepdims=True)                  # (C, 1)
            h = jnp.sum(w1t * gap, axis=0, keepdims=True) + b1        # (1, R)
            h = jnp.maximum(h, 0.0)
            s = jnp.sum(w2 * h, axis=1, keepdims=True) + b2           # (C, 1)
            se = jax.nn.sigmoid(s)                                    # (C, 1)

            # ---- combine: se*x + gamma*(acc/l) + x == x*(se+1) + acc*(gamma/l) -------
            scale = gamma * pl.reciprocal(l, approx=False)            # (C, 1)
            out_ref[b] = x * (se + 1.0) + acc * scale

    return kernel


def _num_tensorcores():
    """TensorCores per chip: 2 on v7x / v4 / v5p (megacore), 1 on v5e / v6e."""
    try:
        kind = jax.devices()[0].device_kind.lower()
    except Exception:
        return 1
    if any(tag in kind for tag in ("v7", "7x", "v4", "v5p")):
        return 2
    return 1


def _pick_batch_tile(B, C, N, num_tc, budget_bytes=16 << 20):
    """Largest batch tile that (a) divides B, (b) leaves >= num_tc grid steps so every
    TensorCore gets work, and (c) keeps the double-buffered x + out blocks under a
    conservative VMEM budget (v5e default scoped limit; well under v7x's 64 MiB)."""
    best = 1
    for bt in range(1, B + 1):
        if B % bt:
            continue
        if B // bt < min(num_tc, B):
            continue
        if 2 * (2 * bt * C * N * 4) > budget_bytes:   # x + out, each double-buffered
            continue
        best = bt
    return best


def se_cam_forward(x_nchw, params):
    """SE_CAM_Module forward. x_nchw: (B, C, H, W) f32 -> (B, C, H, W) f32."""
    B, C, H, W = x_nchw.shape
    N = H * W
    R = params["w1t"].shape[1]
    x_flat = x_nchw.reshape(B, C, N)        # free row-major reshape, lane-dense last dim

    num_tc = _num_tensorcores()
    bt = _pick_batch_tile(B, C, N, num_tc)  # v5e/v6e: bt=B (1 step); v7x: bt=B/2 (2 steps)
    steps = B // bt

    flops = B * (2 * C * C * N          # energy = x @ x.T
                 + 2 * C * C * N        # acc = p @ x
                 + 6 * C * N)           # epilogue / elementwise (approx)
    transcendentals = B * (C * C + C)   # softmax exps + sigmoid + reciprocal
    bytes_accessed = 4 * (2 * B * C * N + 2 * C * R + C + R + 1)

    out_flat = pl.pallas_call(
        _make_se_cam_kernel(bt),
        out_shape=jax.ShapeDtypeStruct((B, C, N), jnp.float32),
        grid_spec=pltpu.PrefetchScalarGridSpec(
            num_scalar_prefetch=0,
            grid=(steps,),
            in_specs=[
                pl.BlockSpec((bt, C, N), lambda b: (b, 0, 0)),       # x (batch-tile block)
                pl.BlockSpec((C, R), lambda b: (0, 0)),              # W1^T
                pl.BlockSpec((1, R), lambda b: (0, 0)),              # b1
                pl.BlockSpec((C, R), lambda b: (0, 0)),              # W2
                pl.BlockSpec((C, 1), lambda b: (0, 0)),              # b2
                pl.BlockSpec(memory_space=pltpu.MemorySpace.SMEM),   # gamma scalar
            ],
            out_specs=pl.BlockSpec((bt, C, N), lambda b: (b, 0, 0)),
        ),
        compiler_params=pltpu.CompilerParams(
            dimension_semantics=("parallel",)),
        cost_estimate=pl.CostEstimate(flops=flops,
                                      transcendentals=transcendentals,
                                      bytes_accessed=bytes_accessed),
    )(x_flat, params["w1t"], params["b1"], params["w2"], params["b2"], params["gamma"])

    return out_flat.reshape(B, C, H, W)


def init_params(key, C):
    """Deterministic synthetic parameters matching SE_CAM_Module(in_dim=C)."""
    assert C >= 16, "SE bottleneck is in_dim // 16; need C >= 16"
    R = C // 16
    ks = jax.random.split(key, 4)
    w1 = 0.1 * jax.random.normal(ks[0], (R, C), jnp.float32)   # Conv2d(C, R, 1) weight
    b1 = 0.1 * jax.random.normal(ks[1], (R,), jnp.float32)
    w2 = 0.1 * jax.random.normal(ks[2], (C, R), jnp.float32)   # Conv2d(R, C, 1) weight
    b2 = 0.1 * jax.random.normal(ks[3], (C,), jnp.float32)
    gamma = jnp.array([[0.5]], jnp.float32)                    # see TODO(synk) above
    return {
        "w1t": jnp.transpose(w1),      # (C, R)
        "b1": b1.reshape(1, R),        # (1, R)
        "w2": w2,                      # (C, R)
        "b2": b2.reshape(C, 1),        # (C, 1)
        "gamma": gamma,                # (1, 1) scalar, SMEM
    }


def reference_nchw(x, params):
    """Pure-JAX reference mirroring the PyTorch forward (NCHW)."""
    B, C, H, W = x.shape
    N = H * W
    hi = lax.Precision.HIGHEST
    q = x.reshape(B, C, N)
    energy = jnp.einsum('bcn,bdn->bcd', q, q, precision=hi)            # (B, C, C)
    energy_new = jnp.max(energy, axis=-1, keepdims=True) - energy
    attention = jax.nn.softmax(energy_new, axis=-1)
    out_cam = jnp.einsum('bcd,bdn->bcn', attention, q,
                         precision=hi).reshape(B, C, H, W)

    gap = jnp.mean(x, axis=(2, 3))                                     # (B, C)
    w1 = params["w1t"].T                                               # (R, C)
    h = jnp.maximum(jnp.dot(gap, w1.T, precision=hi)
                    + params["b1"].reshape(-1), 0.0)                   # (B, R)
    s = jnp.dot(h, params["w2"].T, precision=hi) + params["b2"].reshape(-1)
    se = jax.nn.sigmoid(s)[:, :, None, None]                           # (B, C, 1, 1)

    gamma = params["gamma"][0, 0]
    return se * x + gamma * out_cam + x


if __name__ == "__main__":
    B, C, H, W = 2, 32, 16, 16      # C must be >= 16 (SE bottleneck C // 16)

    key = jax.random.PRNGKey(0)
    kx, kp = jax.random.split(key)
    x = jax.random.normal(kx, (B, C, H, W), jnp.float32)
    params = init_params(kp, C)

    out = se_cam_forward(x, params)
    out = jax.block_until_ready(out)

    ref = reference_nchw(x, params)
    np.testing.assert_allclose(np.asarray(out), np.asarray(ref), rtol=1e-4, atol=1e-4)
    assert out.shape == (B, C, H, W)
    print("KERNEL_OK")
</pallas_src>

<mosaic_0001>
module attributes {stable_mosaic.version = 11 : i64} {
  func.func @kernel(%arg0: i32, %arg1: memref<2x32x256xf32, #tpu.memory_space<vmem>>, %arg2: memref<32x2xf32, #tpu.memory_space<vmem>>, %arg3: memref<1x2xf32, #tpu.memory_space<vmem>>, %arg4: memref<32x2xf32, #tpu.memory_space<vmem>>, %arg5: memref<32x1xf32, #tpu.memory_space<vmem>>, %arg6: memref<1x1xf32, #tpu.memory_space<smem>>, %arg7: memref<2x32x256xf32, #tpu.memory_space<vmem>>) attributes {dimension_semantics = [#tpu.dimension_semantics<parallel>], iteration_bounds = array<i64: 1>, scalar_prefetch = 0 : i64, scratch_operands = 0 : i64, tpu.core_type = #tpu.core_type<tc>, window_params = [{transform_indices = @transform_0, window_bounds = array<i64: 2, 32, 256>}, {pipeline_mode = #tpu.pipeline_mode<synchronous>, transform_indices = @transform_1, window_bounds = array<i64: 32, 2>}, {pipeline_mode = #tpu.pipeline_mode<synchronous>, transform_indices = @transform_2, window_bounds = array<i64: 1, 2>}, {pipeline_mode = #tpu.pipeline_mode<synchronous>, transform_indices = @transform_3, window_bounds = array<i64: 32, 2>}, {pipeline_mode = #tpu.pipeline_mode<synchronous>, transform_indices = @transform_4, window_bounds = array<i64: 32, 1>}, {transform_indices = @transform_5, window_bounds = array<i64: 1, 1>}, {transform_indices = @transform_6, window_bounds = array<i64: 2, 32, 256>}]} {
    %c0 = arith.constant 0 : index
    %c0_0 = arith.constant 0 : index
    %0 = memref.load %arg6[%c0, %c0_0] : memref<1x1xf32, #tpu.memory_space<smem>>
    %c0_1 = arith.constant 0 : index
    %c0_2 = arith.constant 0 : index
    %1 = vector.load %arg2[%c0_1, %c0_2] : memref<32x2xf32, #tpu.memory_space<vmem>>, vector<32x2xf32>
    %c0_3 = arith.constant 0 : index
    %c0_4 = arith.constant 0 : index
    %2 = vector.load %arg3[%c0_3, %c0_4] : memref<1x2xf32, #tpu.memory_space<vmem>>, vector<1x2xf32>
    %c0_5 = arith.constant 0 : index
    %c0_6 = arith.constant 0 : index
    %3 = vector.load %arg4[%c0_5, %c0_6] : memref<32x2xf32, #tpu.memory_space<vmem>>, vector<32x2xf32>
    %c0_7 = arith.constant 0 : index
    %c0_8 = arith.constant 0 : index
    %4 = vector.load %arg5[%c0_7, %c0_8] : memref<32x1xf32, #tpu.memory_space<vmem>>, vector<32x1xf32>
    %c0_9 = arith.constant 0 : index
    %c0_10 = arith.constant 0 : index
    %c0_11 = arith.constant 0 : index
    %5 = vector.load %arg1[%c0_9, %c0_10, %c0_11] : memref<2x32x256xf32, #tpu.memory_space<vmem>>, vector<1x32x256xf32>
    %6 = vector.shape_cast %5 : vector<1x32x256xf32> to vector<32x256xf32>
    %cst = arith.constant dense<0.000000e+00> : vector<32x32xf32>
    %7 = tpu.matmul %6, %6, %cst {dimension_numbers = #tpu.dot_dimension_numbers<[1], [1], [0], [0], [0, 0, 1, 0], [], []>} : vector<32x256xf32>, vector<32x256xf32>, vector<32x32xf32> -> vector<32x32xf32>
    %cst_12 = arith.constant dense<0x7F800000> : vector<32xf32>
    %8 = vector.multi_reduction <minimumf>, %7, %cst_12 [1] : vector<32x32xf32> to vector<32xf32>
    %9 = vector.shape_cast %8 : vector<32xf32> to vector<32x1xf32>
    %10 = vector.broadcast %9 : vector<32x1xf32> to vector<32x32xf32>
    %11 = arith.subf %10, %7 : vector<32x32xf32>
    %12 = math.exp %11 : vector<32x32xf32>
    %cst_13 = arith.constant dense<0.000000e+00> : vector<32xf32>
    %13 = vector.multi_reduction <add>, %12, %cst_13 [1] : vector<32x32xf32> to vector<32xf32>
    %14 = vector.shape_cast %13 : vector<32xf32> to vector<32x1xf32>
    %cst_14 = arith.constant dense<0.000000e+00> : vector<32x256xf32>
    %15 = tpu.matmul %12, %6, %cst_14 {dimension_numbers = #tpu.dot_dimension_numbers<[1], [0], [0], [1], [0, 0, 1, 1], [], []>} : vector<32x32xf32>, vector<32x256xf32>, vector<32x256xf32> -> vector<32x256xf32>
    %cst_15 = arith.constant dense<0.000000e+00> : vector<32xf32>
    %16 = vector.multi_reduction <add>, %6, %cst_15 [1] : vector<32x256xf32> to vector<32xf32>
    %17 = vector.shape_cast %16 : vector<32xf32> to vector<32x1xf32>
    %cst_16 = arith.constant 2.560000e+02 : f32
    %18 = vector.broadcast %cst_16 : f32 to vector<32x1xf32>
    %19 = arith.divf %17, %18 : vector<32x1xf32>
    %20 = vector.broadcast %19 : vector<32x1xf32> to vector<32x2xf32>
    %21 = arith.mulf %1, %20 : vector<32x2xf32>
    %cst_17 = arith.constant dense<0.000000e+00> : vector<2xf32>
    %22 = vector.multi_reduction <add>, %21, %cst_17 [0] : vector<32x2xf32> to vector<2xf32>
    %23 = vector.shape_cast %22 : vector<2xf32> to vector<1x2xf32>
    %24 = arith.addf %23, %2 : vector<1x2xf32>
    %cst_18 = arith.constant 0.000000e+00 : f32
    %25 = vector.broadcast %cst_18 : f32 to vector<1x2xf32>
    %26 = arith.maximumf %24, %25 : vector<1x2xf32>
    %27 = vector.broadcast %26 : vector<1x2xf32> to vector<32x2xf32>
    %28 = arith.mulf %3, %27 : vector<32x2xf32>
    %cst_19 = arith.constant dense<0.000000e+00> : vector<32xf32>
    %29 = vector.multi_reduction <add>, %28, %cst_19 [1] : vector<32x2xf32> to vector<32xf32>
    %30 = vector.shape_cast %29 : vector<32xf32> to vector<32x1xf32>
    %31 = arith.addf %30, %4 : vector<32x1xf32>
    %32 = arith.negf %31 : vector<32x1xf32>
    %33 = math.exp %32 : vector<32x1xf32>
    %cst_20 = arith.constant 1.000000e+00 : f32
    %34 = vector.broadcast %cst_20 : f32 to vector<32x1xf32>
    %35 = arith.addf %34, %33 : vector<32x1xf32>
    %36 = arith.divf %34, %35 : vector<32x1xf32>
    %37 = tpu.reciprocal %14 : vector<32x1xf32> -> vector<32x1xf32>
    %38 = vector.broadcast %0 : f32 to vector<32x1xf32>
    %39 = arith.mulf %38, %37 : vector<32x1xf32>
    %cst_21 = arith.constant 1.000000e+00 : f32
    %40 = vector.broadcast %cst_21 : f32 to vector<32x1xf32>
    %41 = arith.addf %36, %40 : vector<32x1xf32>
    %42 = vector.broadcast %41 : vector<32x1xf32> to vector<32x256xf32>
    %43 = arith.mulf %6, %42 : vector<32x256xf32>
    %44 = vector.broadcast %39 : vector<32x1xf32> to vector<32x256xf32>
    %45 = arith.mulf %15, %44 : vector<32x256xf32>
    %46 = arith.addf %43, %45 : vector<32x256xf32>
    %c0_22 = arith.constant 0 : index
    %c0_23 = arith.constant 0 : index
    %c0_24 = arith.constant 0 : index
    %47 = vector.load %arg7[%c0_22, %c0_23, %c0_24] : memref<2x32x256xf32, #tpu.memory_space<vmem>>, vector<1x32x256xf32>
    %48 = vector.shape_cast %47 : vector<1x32x256xf32> to vector<32x256xf32>
    %49 = vector.shape_cast %46 : vector<32x256xf32> to vector<1x32x256xf32>
    tpu.vector_store %arg7[%c0_22, %c0_23, %c0_24], %49 {strides = array<i32>} : memref<2x32x256xf32, #tpu.memory_space<vmem>>, vector<1x32x256xf32>,
    %c1 = arith.constant 1 : index
    %c0_25 = arith.constant 0 : index
    %c0_26 = arith.constant 0 : index
    %50 = vector.load %arg1[%c1, %c0_25, %c0_26] : memref<2x32x256xf32, #tpu.memory_space<vmem>>, vector<1x32x256xf32>
    %51 = vector.shape_cast %50 : vector<1x32x256xf32> to vector<32x256xf32>
    %cst_27 = arith.constant dense<0.000000e+00> : vector<32x32xf32>
    %52 = tpu.matmul %51, %51, %cst_27 {dimension_numbers = #tpu.dot_dimension_numbers<[1], [1], [0], [0], [0, 0, 1, 0], [], []>} : vector<32x256xf32>, vector<32x256xf32>, vector<32x32xf32> -> vector<32x32xf32>
    %cst_28 = arith.constant dense<0x7F800000> : vector<32xf32>
    %53 = vector.multi_reduction <minimumf>, %52, %cst_28 [1] : vector<32x32xf32> to vector<32xf32>
    %54 = vector.shape_cast %53 : vector<32xf32> to vector<32x1xf32>
    %55 = vector.broadcast %54 : vector<32x1xf32> to vector<32x32xf32>
    %56 = arith.subf %55, %52 : vector<32x32xf32>
    %57 = math.exp %56 : vector<32x32xf32>
    %cst_29 = arith.constant dense<0.000000e+00> : vector<32xf32>
    %58 = vector.multi_reduction <add>, %57, %cst_29 [1] : vector<32x32xf32> to vector<32xf32>
    %59 = vector.shape_cast %58 : vector<32xf32> to vector<32x1xf32>
    %cst_30 = arith.constant dense<0.000000e+00> : vector<32x256xf32>
    %60 = tpu.matmul %57, %51, %cst_30 {dimension_numbers = #tpu.dot_dimension_numbers<[1], [0], [0], [1], [0, 0, 1, 1], [], []>} : vector<32x32xf32>, vector<32x256xf32>, vector<32x256xf32> -> vector<32x256xf32>
    %cst_31 = arith.constant dense<0.000000e+00> : vector<32xf32>
    %61 = vector.multi_reduction <add>, %51, %cst_31 [1] : vector<32x256xf32> to vector<32xf32>
    %62 = vector.shape_cast %61 : vector<32xf32> to vector<32x1xf32>
    %cst_32 = arith.constant 2.560000e+02 : f32
    %63 = vector.broadcast %cst_32 : f32 to vector<32x1xf32>
    %64 = arith.divf %62, %63 : vector<32x1xf32>
    %65 = vector.broadcast %64 : vector<32x1xf32> to vector<32x2xf32>
    %66 = arith.mulf %1, %65 : vector<32x2xf32>
    %cst_33 = arith.constant dense<0.000000e+00> : vector<2xf32>
    %67 = vector.multi_reduction <add>, %66, %cst_33 [0] : vector<32x2xf32> to vector<2xf32>
    %68 = vector.shape_cast %67 : vector<2xf32> to vector<1x2xf32>
    %69 = arith.addf %68, %2 : vector<1x2xf32>
    %cst_34 = arith.constant 0.000000e+00 : f32
    %70 = vector.broadcast %cst_34 : f32 to vector<1x2xf32>
    %71 = arith.maximumf %69, %70 : vector<1x2xf32>
    %72 = vector.broadcast %71 : vector<1x2xf32> to vector<32x2xf32>
    %73 = arith.mulf %3, %72 : vector<32x2xf32>
    %cst_35 = arith.constant dense<0.000000e+00> : vector<32xf32>
    %74 = vector.multi_reduction <add>, %73, %cst_35 [1] : vector<32x2xf32> to vector<32xf32>
    %75 = vector.shape_cast %74 : vector<32xf32> to vector<32x1xf32>
    %76 = arith.addf %75, %4 : vector<32x1xf32>
    %77 = arith.negf %76 : vector<32x1xf32>
    %78 = math.exp %77 : vector<32x1xf32>
    %cst_36 = arith.constant 1.000000e+00 : f32
    %79 = vector.broadcast %cst_36 : f32 to vector<32x1xf32>
    %80 = arith.addf %79, %78 : vector<32x1xf32>
    %81 = arith.divf %79, %80 : vector<32x1xf32>
    %82 = tpu.reciprocal %59 : vector<32x1xf32> -> vector<32x1xf32>
    %83 = vector.broadcast %0 : f32 to vector<32x1xf32>
    %84 = arith.mulf %83, %82 : vector<32x1xf32>
    %cst_37 = arith.constant 1.000000e+00 : f32
    %85 = vector.broadcast %cst_37 : f32 to vector<32x1xf32>
    %86 = arith.addf %81, %85 : vector<32x1xf32>
    %87 = vector.broadcast %86 : vector<32x1xf32> to vector<32x256xf32>
    %88 = arith.mulf %51, %87 : vector<32x256xf32>
    %89 = vector.broadcast %84 : vector<32x1xf32> to vector<32x256xf32>
    %90 = arith.mulf %60, %89 : vector<32x256xf32>
    %91 = arith.addf %88, %90 : vector<32x256xf32>
    %c1_38 = arith.constant 1 : index
    %c0_39 = arith.constant 0 : index
    %c0_40 = arith.constant 0 : index
    %92 = vector.load %arg7[%c1_38, %c0_39, %c0_40] : memref<2x32x256xf32, #tpu.memory_space<vmem>>, vector<1x32x256xf32>
    %93 = vector.shape_cast %92 : vector<1x32x256xf32> to vector<32x256xf32>
    %94 = vector.shape_cast %91 : vector<32x256xf32> to vector<1x32x256xf32>
    tpu.vector_store %arg7[%c1_38, %c0_39, %c0_40], %94 {strides = array<i32>} : memref<2x32x256xf32, #tpu.memory_space<vmem>>, vector<1x32x256xf32>,
    return
  }
  func.func @transform_0(%arg0: i32) -> (i32, i32, i32) {
    %c0_i32 = arith.constant 0 : i32
    %c0_i32_0 = arith.constant 0 : i32
    %c0_i32_1 = arith.constant 0 : i32
    return %arg0, %c0_i32, %c0_i32_0 : i32, i32, i32
  }
  func.func @transform_1(%arg0: i32) -> (i32, i32) {
    %c0_i32 = arith.constant 0 : i32
    %c0_i32_0 = arith.constant 0 : i32
    %c0_i32_1 = arith.constant 0 : i32
    return %c0_i32, %c0_i32_0 : i32, i32
  }
  func.func @transform_2(%arg0: i32) -> (i32, i32) {
    %c0_i32 = arith.constant 0 : i32
    %c0_i32_0 = arith.constant 0 : i32
    %c0_i32_1 = arith.constant 0 : i32
    return %c0_i32, %c0_i32_0 : i32, i32
  }
  func.func @transform_3(%arg0: i32) -> (i32, i32) {
    %c0_i32 = arith.constant 0 : i32
    %c0_i32_0 = arith.constant 0 : i32
    %c0_i32_1 = arith.constant 0 : i32
    return %c0_i32, %c0_i32_0 : i32, i32
  }
  func.func @transform_4(%arg0: i32) -> (i32, i32) {
    %c0_i32 = arith.constant 0 : i32
    %c0_i32_0 = arith.constant 0 : i32
    %c0_i32_1 = arith.constant 0 : i32
    return %c0_i32, %c0_i32_0 : i32, i32
  }
  func.func @transform_5(%arg0: i32) -> (i32, i32) {
    %c0_i32 = arith.constant 0 : i32
    %c0_i32_0 = arith.constant 0 : i32
    %c0_i32_1 = arith.constant 0 : i32
    return %c0_i32, %c0_i32_0 : i32, i32
  }
  func.func @transform_6(%arg0: i32) -> (i32, i32, i32) {
    %c0_i32 = arith.constant 0 : i32
    %c0_i32_0 = arith.constant 0 : i32
    %c0_i32_1 = arith.constant 0 : i32
    return %arg0, %c0_i32, %c0_i32_0 : i32, i32, i32
  }
}

</mosaic_0001>

<llo_original>
// kernel: tpu_custom_call.1
$region0: #{tpu_custom_call.1}
  #allocation0 [shape = 'u32[]', space=smem, size = 0x4, offset = 0x4, fixed_abs, tag = 'smem constant byte address 0x4 - core index']
  #allocation1 [shape = 'u32[72,128]{1,0:T(1,128)}', space=vmem, size = 0x9000, scoped, tag = 'internal scratch']
  #allocation2 [shape = 'f32[1,1]{1,0:T(1,128)S(6)}', space=smem, size = 0x200, scoped, tag = 'scoped memory for tpu_custom_call.1']
  %s0 = inlined_call_operand.hbm [shape: f32[2,32,256], index: 0, kind: input, shape index: {}]
  %s1 = inlined_call_operand.vmem [shape: f32[32,2], index: 1, kind: input, shape index: {}]
  %s2 = inlined_call_operand.vmem [shape: f32[1,2], index: 2, kind: input, shape index: {}]
  %s3 = inlined_call_operand.vmem [shape: f32[32,2], index: 3, kind: input, shape index: {}]
  %s4 = inlined_call_operand.vmem [shape: f32[32,1], index: 4, kind: input, shape index: {}]
  %s5 = inlined_call_operand.<no memory space> [shape: f32[1,1], index: 5, kind: input, shape index: {}]
  %s6 = inlined_call_operand.hbm [shape: f32[2,32,256], index: 6, kind: output, shape index: {}]
  %s7 = sld [smem:[#allocation0]]
  $region38: #{tpu_custom_call.1} parent=0
    _
  %s9 = ssub.s32 1, %s7
  %s10 = scalar_select 0, %s9, %s7
  %11 = sst [smem:[#allocation2]] %s5
  $region1: #{tpu_custom_call.1} parent=0
    #allocation3 [shape = 'u8[65536]{0}', space=vmem, size = 0x10000, scoped, tag = 'input window, operand 0, single buffered']
    #allocation4 [shape = 's32[1]{0}', space=sflag, size = 0x4, scoped, tag = 'scoped memory for tpu_custom_call.1']
    #allocation5 [shape = 's32[1]{0}', space=sflag, size = 0x4, scoped, tag = 'scoped memory for tpu_custom_call.1']
    #allocation6 [shape = 'u8[65536]{0}', space=vmem, size = 0x10000, scoped, tag = 'output window, operand 0, single buffered']
    %12 = vsyncpa [#allocation4], 0
    %13 = vsyncpa [#allocation5], 0
    // Predicated region
    $region2: #{tpu_custom_call.1} parent=1 // pred_check
      _
    $region3: #{tpu_custom_call.1} parent=1 // pred_check_branch
      %15 = sbr.rel (0) target = $region5
    $region4: #{tpu_custom_call.1} parent=1 // pred_region
      %17 = vsyncadd [#allocation4], 0
      %s18 = sshll.u32 %s0, 4
      %s19 = int_to_ptr.hbm [resolvable:$true] %s18
      %s20 = sshll.u32 [#allocation3], 4
      %s21 = int_to_ptr.vmem [resolvable:$true] %s20
      %26 = dma.hbm_to_vmem [thread:$0]  %s19, 2048, %s21, [#allocation4], 256, 256, 16
    $region5: #{tpu_custom_call.1} parent=1 // pred_fallthru
      _
    // Predicated region
    $region6: #{tpu_custom_call.1} parent=1 // pred_check
      _
    $region7: #{tpu_custom_call.1} parent=1 // pred_check_branch
      %28 = sbr.rel (0) target = $region9
    $region8: #{tpu_custom_call.1} parent=1 // pred_region
      _
    $region9: #{tpu_custom_call.1} parent=1 // pred_fallthru
      _
    // Predicated region
    $region10: #{tpu_custom_call.1} parent=1 // pred_check
      _
    $region11: #{tpu_custom_call.1} parent=1 // pred_check_branch
      %30 = sbr.rel (0) target = $region13
    $region12: #{tpu_custom_call.1} parent=1 // pred_region
      _
    $region13: #{tpu_custom_call.1} parent=1 // pred_fallthru
      _
    // Predicated region
    $region14: #{tpu_custom_call.1} parent=1 // pred_check
      _
    $region15: #{tpu_custom_call.1} parent=1 // pred_check_branch
      %32 = sbr.rel (0) target = $region17
    $region16: #{tpu_custom_call.1} parent=1 // pred_region
      _
    $region17: #{tpu_custom_call.1} parent=1 // pred_fallthru
      _
    // Predicated region
    $region18: #{tpu_custom_call.1} parent=1 // pred_check
      _
    $region19: #{tpu_custom_call.1} parent=1 // pred_check_branch
      %34 = sbr.rel (0) target = $region21
    $region20: #{tpu_custom_call.1} parent=1 // pred_region
      _
    $region21: #{tpu_custom_call.1} parent=1 // pred_fallthru
      _
    // Predicated region
    $region22: #{tpu_custom_call.1} parent=1 // pred_check
      _
    $region23: #{tpu_custom_call.1} parent=1 // pred_check_branch
      %36 = sbr.rel (0) target = $region25
    $region24: #{tpu_custom_call.1} parent=1 // pred_region
      _
    $region25: #{tpu_custom_call.1} parent=1 // pred_fallthru
      _
    // Predicated region
    $region26: #{tpu_custom_call.1} parent=1 // pred_check
      _
    $region27: #{tpu_custom_call.1} parent=1 // pred_check_branch
      %38 = sbr.rel (0) target = $region29
    $region28: #{tpu_custom_call.1} parent=1 // pred_region
      %40 = dma.done [#allocation4], 2048
    $region29: #{tpu_custom_call.1} parent=1 // pred_fallthru
      _
    %s41 = sld [smem:[#allocation2]]
    %v42 = vld [vmem:[%s1] sm:$0xff]
    %v43 = vld [vmem:[%s1 + $0x8] sm:$0xff]
    %v44 = vld [vmem:[%s1 + $0x10] sm:$0xff]
    %v45 = vld [vmem:[%s1 + $0x18] sm:$0xff]
    %v46 = vld [vmem:[%s2] sm:$0x1]
    %v47 = vld [vmem:[%s3] sm:$0xff]
    %v48 = vld [vmem:[%s3 + $0x8] sm:$0xff]
    %v49 = vld [vmem:[%s3 + $0x10] sm:$0xff]
    %v50 = vld [vmem:[%s3 + $0x18] sm:$0xff]
    %v51 = vld [vmem:[%s4] sm:$0xff]
    %v52 = vld [vmem:[%s4 + $0x8] sm:$0xff]
    %v53 = vld [vmem:[%s4 + $0x10] sm:$0xff]
    %v54 = vld [vmem:[%s4 + $0x18] sm:$0xff]
    %v55 = vld [vmem:[#allocation3] sm:$0xff]
    %v56 = vld [vmem:[#allocation3 + $0x8] sm:$0xff]
    %v57 = vld [vmem:[#allocation3 + $0x10] sm:$0xff]
    %v58 = vld [vmem:[#allocation3 + $0x18] sm:$0xff]
    %v59 = vld [vmem:[#allocation3 + $0x20] sm:$0xff]
    %v60 = vld [vmem:[#allocation3 + $0x28] sm:$0xff]
    %v61 = vld [vmem:[#allocation3 + $0x30] sm:$0xff]
    %v62 = vld [vmem:[#allocation3 + $0x38] sm:$0xff]
    %63 = vmatpush.xpose.msra.mxu0 0.0
    %64 = vmatpush.xpose.msra.mxu0 0.0
    %65 = vmatpush.xpose.msra.mxu0 0.0
    %66 = vmatpush.xpose.msra.mxu0 0.0
    %67 = vmatpush.xpose.msra.mxu0 0.0
    %68 = vmatpush.xpose.msra.mxu0 0.0
    %69 = vmatpush.xpose.msra.mxu0 0.0
    %70 = vmatpush.xpose.msra.mxu0 0.0
    %71 = vmatpush.xpose.msra.mxu0 0.0
    %72 = vmatpush.xpose.msra.mxu0 0.0
    %73 = vmatpush.xpose.msra.mxu0 0.0
    %74 = vmatpush.xpose.msra.mxu0 0.0
    %75 = vmatpush.xpose.msra.mxu0 %v61
    %76 = vmatpush.xpose.msra.mxu0 %v59
    %77 = vmatpush.xpose.msra.mxu0 %v57
    %78 = vmatpush.xpose.msra.mxu0 %v55
    %79 = vmatmul.f32.gmra.mxu0 %v55
    %v80 = vpop.f32.mrf.mxu0
    %v81 = vadd.f32 0.0, %v80
    %82 = vmatmul.f32.gmra.mxu0 %v57
    %v83 = vpop.f32.mrf.mxu0
    %v84 = vadd.f32 0.0, %v83
    %85 = vmatmul.f32.gmra.mxu0 %v59
    %v86 = vpop.f32.mrf.mxu0
    %v87 = vadd.f32 0.0, %v86
    %88 = vmatmul.f32.gmra.mxu0 %v61
    %v89 = vpop.f32.mrf.mxu0
    %v90 = vadd.f32 0.0, %v89
    %91 = vdwg.mxu0
    %92 = vmatpush.xpose.msra.mxu0 0.0
    %93 = vmatpush.xpose.msra.mxu0 0.0
    %94 = vmatpush.xpose.msra.mxu0 0.0
    %95 = vmatpush.xpose.msra.mxu0 0.0
    %96 = vmatpush.xpose.msra.mxu0 0.0
    %97 = vmatpush.xpose.msra.mxu0 0.0
    %98 = vmatpush.xpose.msra.mxu0 0.0
    %99 = vmatpush.xpose.msra.mxu0 0.0
    %100 = vmatpush.xpose.msra.mxu0 0.0
    %101 = vmatpush.xpose.msra.mxu0 0.0
    %102 = vmatpush.xpose.msra.mxu0 0.0
    %103 = vmatpush.xpose.msra.mxu0 0.0
    %104 = vmatpush.xpose.msra.mxu0 %v62
    %105 = vmatpush.xpose.msra.mxu0 %v60
    %106 = vmatpush.xpose.msra.mxu0 %v58
    %107 = vmatpush.xpose.msra.mxu0 %v56
    %108 = vmatmul.f32.gmra.mxu0 %v56
    %v109 = vpop.f32.mrf.mxu0
    %v110 = vadd.f32 %v81, %v109
    %111 = vmatmul.f32.gmra.mxu0 %v58
    %v112 = vpop.f32.mrf.mxu0
    %v113 = vadd.f32 %v84, %v112
    %114 = vmatmul.f32.gmra.mxu0 %v60
    %v115 = vpop.f32.mrf.mxu0
    %v116 = vadd.f32 %v87, %v115
    %117 = vmatmul.f32.gmra.mxu0 %v62
    %v118 = vpop.f32.mrf.mxu0
    %v119 = vadd.f32 %v90, %v118
    %120 = vdwg.mxu0
    %vm121 = vcmask 261120
    %v122 = vsel %vm121, %v110, inf
    %123 = vmin.xlane.f32.xlu0 %v122
    %v124 = vpop.xlane.xlu0 %123
    %v125 = vsel %vm121, %v113, inf
    %126 = vmin.xlane.f32.xlu0 %v125
    %v127 = vpop.xlane.xlu0 %126
    %v128 = vsel %vm121, %v116, inf
    %129 = vmin.xlane.f32.xlu0 %v128
    %v130 = vpop.xlane.xlu0 %129
    %v131 = vsel %vm121, %v119, inf
    %132 = vmin.xlane.f32.xlu0 %v131
    %v133 = vpop.xlane.xlu0 %132
    %v134 = vsub.f32 %v124, %v110
    %v135 = vsub.f32 %v127, %v113
    %v136 = vsub.f32 %v130, %v116
    %v137 = vsub.f32 %v133, %v119
    %v138 = vmul.f32 %v134, 1.442695
    %v139 = vpow.pop %v138
    %v140 = vmul.f32 %v135, 1.442695
    %v141 = vpow.pop %v140
    %v142 = vmul.f32 %v136, 1.442695
    %v143 = vpow.pop %v142
    %v144 = vmul.f32 %v137, 1.442695
    %v145 = vpow.pop %v144
    %v146 = vsel %vm121, %v139, 0.0
    %147 = vadd.xlane.f32.xlu0 %v146
    %v148 = vpop.xlane.xlu0 %147
    %v149 = vsel %vm121, %v141, 0.0
    %150 = vadd.xlane.f32.xlu0 %v149
    %v151 = vpop.xlane.xlu0 %150
    %v152 = vsel %vm121, %v143, 0.0
    %153 = vadd.xlane.f32.xlu0 %v152
    %v154 = vpop.xlane.xlu0 %153
    %v155 = vsel %vm121, %v145, 0.0
    %156 = vadd.xlane.f32.xlu0 %v155
    %v157 = vpop.xlane.xlu0 %156
    %v159 = vsel %vm121, %v139, 0
    %v162 = vsel %vm121, %v141, 0
    %v165 = vsel %vm121, %v143, 0
    %v168 = vsel %vm121, %v145, 0
    %170 = vmatpush.msra.mxu0 0.0
    %171 = vmatpush.msra.mxu0 0.0
    %172 = vmatpush.msra.mxu0 0.0
    %173 = vmatpush.msra.mxu0 0.0
    %174 = vmatpush.msra.mxu0 0.0
    %175 = vmatpush.msra.mxu0 0.0
    %176 = vmatpush.msra.mxu0 0.0
    %177 = vmatpush.msra.mxu0 0.0
    %178 = vmatpush.msra.mxu0 0.0
    %179 = vmatpush.msra.mxu0 0.0
    %180 = vmatpush.msra.mxu0 0.0
    %181 = vmatpush.msra.mxu0 0.0
    %182 = vmatpush.msra.mxu0 %v61
    %183 = vmatpush.msra.mxu0 %v59
    %184 = vmatpush.msra.mxu0 %v57
    %185 = vmatpush.msra.mxu0 %v55
    %186 = vmatmul.f32.gmra.mxu0 %v159
    %v187 = vpop.f32.mrf.mxu0
    %v188 = vadd.f32 0.0, %v187
    %189 = vmatmul.f32.gmra.mxu0 %v162
    %v190 = vpop.f32.mrf.mxu0
    %v191 = vadd.f32 0.0, %v190
    %192 = vmatmul.f32.gmra.mxu0 %v165
    %v193 = vpop.f32.mrf.mxu0
    %v194 = vadd.f32 0.0, %v193
    %195 = vmatmul.f32.gmra.mxu0 %v168
    %v196 = vpop.f32.mrf.mxu0
    %v197 = vadd.f32 0.0, %v196
    %198 = vdwg.mxu0
    %199 = vmatpush.msra.mxu0 0.0
    %200 = vmatpush.msra.mxu0 0.0
    %201 = vmatpush.msra.mxu0 0.0
    %202 = vmatpush.msra.mxu0 0.0
    %203 = vmatpush.msra.mxu0 0.0
    %204 = vmatpush.msra.mxu0 0.0
    %205 = vmatpush.msra.mxu0 0.0
    %206 = vmatpush.msra.mxu0 0.0
    %207 = vmatpush.msra.mxu0 0.0
    %208 = vmatpush.msra.mxu0 0.0
    %209 = vmatpush.msra.mxu0 0.0
    %210 = vmatpush.msra.mxu0 0.0
    %211 = vmatpush.msra.mxu0 %v62
    %212 = vmatpush.msra.mxu0 %v60
    %213 = vmatpush.msra.mxu0 %v58
    %214 = vmatpush.msra.mxu0 %v56
    %215 = vmatmul.f32.gmra.mxu0 %v159
    %v216 = vpop.f32.mrf.mxu0
    %v217 = vadd.f32 0.0, %v216
    %218 = vmatmul.f32.gmra.mxu0 %v162
    %v219 = vpop.f32.mrf.mxu0
    %v220 = vadd.f32 0.0, %v219
    %221 = vmatmul.f32.gmra.mxu0 %v165
    %v222 = vpop.f32.mrf.mxu0
    %v223 = vadd.f32 0.0, %v222
    %224 = vmatmul.f32.gmra.mxu0 %v168
    %v225 = vpop.f32.mrf.mxu0
    %v226 = vadd.f32 0.0, %v225
    %227 = vdwg.mxu0
    %v228 = vadd.f32 %v55, %v56
    %229 = vadd.xlane.f32.xlu0 %v228
    %v230 = vpop.xlane.xlu0 %229
    %v231 = vadd.f32 %v57, %v58
    %232 = vadd.xlane.f32.xlu0 %v231
    %v233 = vpop.xlane.xlu0 %232
    %v234 = vadd.f32 %v59, %v60
    %235 = vadd.xlane.f32.xlu0 %v234
    %v236 = vpop.xlane.xlu0 %235
    %v237 = vadd.f32 %v61, %v62
    %238 = vadd.xlane.f32.xlu0 %v237
    %v239 = vpop.xlane.xlu0 %238
    %v240 = vrcp.pop 256.0
    %v241 = vmul.f32 256.0, %v240
    %v242 = vsub.f32 1.0, %v241
    %v243 = vmul.f32 %v240, %v242
    %v244 = vadd.f32 %v240, %v243
    %vm245 = vweird.f32 %v240
    %v246 = vsel %vm245, %v240, %v244
    %v247 = vmul.f32 %v230, %v246
    %v248 = vmul.f32 %v233, %v246
    %v249 = vmul.f32 %v236, %v246
    %v250 = vmul.f32 %v239, %v246
    %v251 = vmul.f32 %v42, %v247
    %v252 = vmul.f32 %v43, %v248
    %v253 = vmul.f32 %v44, %v249
    %v254 = vmul.f32 %v45, %v250
    %vm255 = vcmask 15360
    %v256 = vsel %vm255, %v251, 0.0
    %v257 = vsel %vm255, %v252, 0.0
    %v258 = vadd.f32 %v256, %v257
    %v259 = vsel %vm255, %v253, 0.0
    %v260 = vadd.f32 %v258, %v259
    %v261 = vsel %vm255, %v254, 0.0
    %v262 = vadd.f32 %v260, %v261
    %v263 = vrot.slane %v262, 4
    %v264 = vadd.f32 %v262, %v263
    %v265 = vrot.slane %v264, 2
    %v266 = vadd.f32 %v264, %v265
    %v267 = vrot.slane %v266, 1
    %v268 = vadd.f32 %v266, %v267
    %v269 = vadd.f32 %v268, %v46
    %v270 = vmax.f32 %v269, 0.0
    %v271 = vperm.slane %v270, 0
    %v272 = vmul.f32 %v47, %v271
    %v273 = vmul.f32 %v48, %v271
    %v274 = vmul.f32 %v49, %v271
    %v275 = vmul.f32 %v50, %v271
    %v276 = vsel %vm255, %v272, 0.0
    %277 = vadd.xlane.f32.xlu0 %v276
    %v278 = vpop.xlane.xlu0 %277
    %v279 = vsel %vm255, %v273, 0.0
    %280 = vadd.xlane.f32.xlu0 %v279
    %v281 = vpop.xlane.xlu0 %280
    %v282 = vsel %vm255, %v274, 0.0
    %283 = vadd.xlane.f32.xlu0 %v282
    %v284 = vpop.xlane.xlu0 %283
    %v285 = vsel %vm255, %v275, 0.0
    %286 = vadd.xlane.f32.xlu0 %v285
    %v287 = vpop.xlane.xlu0 %286
    %v288 = vadd.f32 %v278, %v51
    %v289 = vadd.f32 %v281, %v52
    %v290 = vadd.f32 %v284, %v53
    %v291 = vadd.f32 %v287, %v54
    %v292 = vxor.u32 %v288, 2147483648
    %v293 = vxor.u32 %v289, 2147483648
    %v294 = vxor.u32 %v290, 2147483648
    %v295 = vxor.u32 %v291, 2147483648
    %v296 = vmul.f32 %v292, 1.442695
    %v297 = vpow.pop %v296
    %v298 = vmul.f32 %v293, 1.442695
    %v299 = vpow.pop %v298
    %v300 = vmul.f32 %v294, 1.442695
    %v301 = vpow.pop %v300
    %v302 = vmul.f32 %v295, 1.442695
    %v303 = vpow.pop %v302
    %v304 = vadd.f32 %v297, 1.0
    %v305 = vadd.f32 %v299, 1.0
    %v306 = vadd.f32 %v301, 1.0
    %v307 = vadd.f32 %v303, 1.0
    %v308 = vrcp.pop %v304
    %v309 = vmul.f32 %v304, %v308
    %v310 = vsub.f32 1.0, %v309
    %v311 = vmul.f32 %v308, %v310
    %v312 = vadd.f32 %v308, %v311
    %vm313 = vweird.f32 %v304
    %vm314 = vweird.f32 %v308
    %vm315 = vmor %vm313, %vm314
    %v316 = vsel %vm315, %v308, %v312
    %v317 = vand.u32 2147483647, %v304
    %vm318 = vcmp.eq.f32.partialorder %v317, 8.507059e+37
    %v319 = vand.u32 %v304, 2147483648
    %v320 = vor.u32 1.1754944e-38, %v319
    %v321 = vsel %vm318, %v320, %v316
    %v322 = vmul.f32 1.0, %v321
    %v323 = vrcp.pop %v305
    %v324 = vmul.f32 %v305, %v323
    %v325 = vsub.f32 1.0, %v324
    %v326 = vmul.f32 %v323, %v325
    %v327 = vadd.f32 %v323, %v326
    %vm328 = vweird.f32 %v305
    %vm329 = vweird.f32 %v323
    %vm330 = vmor %vm328, %vm329
    %v331 = vsel %vm330, %v323, %v327
    %v332 = vand.u32 2147483647, %v305
    %vm333 = vcmp.eq.f32.partialorder %v332, 8.507059e+37
    %v334 = vand.u32 %v305, 2147483648
    %v335 = vor.u32 1.1754944e-38, %v334
    %v336 = vsel %vm333, %v335, %v331
    %v337 = vmul.f32 1.0, %v336
    %v338 = vrcp.pop %v306
    %v339 = vmul.f32 %v306, %v338
    %v340 = vsub.f32 1.0, %v339
    %v341 = vmul.f32 %v338, %v340
    %v342 = vadd.f32 %v338, %v341
    %vm343 = vweird.f32 %v306
    %vm344 = vweird.f32 %v338
    %vm345 = vmor %vm343, %vm344
    %v346 = vsel %vm345, %v338, %v342
    %v347 = vand.u32 2147483647, %v306
    %vm348 = vcmp.eq.f32.partialorder %v347, 8.507059e+37
    %v349 = vand.u32 %v306, 2147483648
    %v350 = vor.u32 1.1754944e-38, %v349
    %v351 = vsel %vm348, %v350, %v346
    %v352 = vmul.f32 1.0, %v351
    %v353 = vrcp.pop %v307
    %v354 = vmul.f32 %v307, %v353
    %v355 = vsub.f32 1.0, %v354
    %v356 = vmul.f32 %v353, %v355
    %v357 = vadd.f32 %v353, %v356
    %vm358 = vweird.f32 %v307
    %vm359 = vweird.f32 %v353
    %vm360 = vmor %vm358, %vm359
    %v361 = vsel %vm360, %v353, %v357
    %v362 = vand.u32 2147483647, %v307
    %vm363 = vcmp.eq.f32.partialorder %v362, 8.507059e+37
    %v364 = vand.u32 %v307, 2147483648
    %v365 = vor.u32 1.1754944e-38, %v364
    %v366 = vsel %vm363, %v365, %v361
    %v367 = vmul.f32 1.0, %v366
    %v368 = vrcp.pop %v148
    %v369 = vmul.f32 %v148, %v368
    %v370 = vsub.f32 1.0, %v369
    %v371 = vmul.f32 %v368, %v370
    %v372 = vadd.f32 %v368, %v371
    %vm373 = vweird.f32 %v148
    %vm374 = vweird.f32 %v368
    %vm375 = vmor %vm373, %vm374
    %v376 = vsel %vm375, %v368, %v372
    %v377 = vand.u32 2147483647, %v148
    %vm378 = vcmp.eq.f32.partialorder %v377, 8.507059e+37
    %v379 = vand.u32 %v148, 2147483648
    %v380 = vor.u32 1.1754944e-38, %v379
    %v381 = vsel %vm378, %v380, %v376
    %v382 = vrcp.pop %v151
    %v383 = vmul.f32 %v151, %v382
    %v384 = vsub.f32 1.0, %v383
    %v385 = vmul.f32 %v382, %v384
    %v386 = vadd.f32 %v382, %v385
    %vm387 = vweird.f32 %v151
    %vm388 = vweird.f32 %v382
    %vm389 = vmor %vm387, %vm388
    %v390 = vsel %vm389, %v382, %v386
    %v391 = vand.u32 2147483647, %v151
    %vm392 = vcmp.eq.f32.partialorder %v391, 8.507059e+37
    %v393 = vand.u32 %v151, 2147483648
    %v394 = vor.u32 1.1754944e-38, %v393
    %v395 = vsel %vm392, %v394, %v390
    %v396 = vrcp.pop %v154
    %v397 = vmul.f32 %v154, %v396
    %v398 = vsub.f32 1.0, %v397
    %v399 = vmul.f32 %v396, %v398
    %v400 = vadd.f32 %v396, %v399
    %vm401 = vweird.f32 %v154
    %vm402 = vweird.f32 %v396
    %vm403 = vmor %vm401, %vm402
    %v404 = vsel %vm403, %v396, %v400
    %v405 = vand.u32 2147483647, %v154
    %vm406 = vcmp.eq.f32.partialorder %v405, 8.507059e+37
    %v407 = vand.u32 %v154, 2147483648
    %v408 = vor.u32 1.1754944e-38, %v407
    %v409 = vsel %vm406, %v408, %v404
    %v410 = vrcp.pop %v157
    %v411 = vmul.f32 %v157, %v410
    %v412 = vsub.f32 1.0, %v411
    %v413 = vmul.f32 %v410, %v412
    %v414 = vadd.f32 %v410, %v413
    %vm415 = vweird.f32 %v157
    %vm416 = vweird.f32 %v410
    %vm417 = vmor %vm415, %vm416
    %v418 = vsel %vm417, %v410, %v414
    %v419 = vand.u32 2147483647, %v157
    %vm420 = vcmp.eq.f32.partialorder %v419, 8.507059e+37
    %v421 = vand.u32 %v157, 2147483648
    %v422 = vor.u32 1.1754944e-38, %v421
    %v423 = vsel %vm420, %v422, %v418
    %v424 = vstv %s41
    %v425 = vmul.f32 %v424, %v381
    %v426 = vmul.f32 %v424, %v395
    %v427 = vmul.f32 %v424, %v409
    %v428 = vmul.f32 %v424, %v423
    %v429 = vadd.f32 %v322, 1.0
    %v430 = vadd.f32 %v337, 1.0
    %v431 = vadd.f32 %v352, 1.0
    %v432 = vadd.f32 %v367, 1.0
    %434 = vset.pattern.permute.xlu0 0
    %435 = vperm.xlu0 %434, %v429
    %v436 = vpop.permute.xlu0 %435
    %439 = vset.pattern.permute.xlu0 0
    %440 = vperm.xlu0 %439, %v430
    %v441 = vpop.permute.xlu0 %440
    %444 = vset.pattern.permute.xlu0 0
    %445 = vperm.xlu0 %444, %v431
    %v446 = vpop.permute.xlu0 %445
    %449 = vset.pattern.permute.xlu0 0
    %450 = vperm.xlu0 %449, %v432
    %v451 = vpop.permute.xlu0 %450
    %v453 = vmul.f32 %v55, %v436
    %v454 = vmul.f32 %v56, %v436
    %v455 = vmul.f32 %v57, %v441
    %v456 = vmul.f32 %v58, %v441
    %v457 = vmul.f32 %v59, %v446
    %v458 = vmul.f32 %v60, %v446
    %v459 = vmul.f32 %v61, %v451
    %v460 = vmul.f32 %v62, %v451
    %v461 = vmul.f32 %v188, %v425
    %v462 = vmul.f32 %v217, %v425
    %v463 = vmul.f32 %v191, %v426
    %v464 = vmul.f32 %v220, %v426
    %v465 = vmul.f32 %v194, %v427
    %v466 = vmul.f32 %v223, %v427
    %v467 = vmul.f32 %v197, %v428
    %v468 = vmul.f32 %v226, %v428
    %v469 = vadd.f32 %v453, %v461
    %v470 = vadd.f32 %v454, %v462
    %v471 = vadd.f32 %v455, %v463
    %v472 = vadd.f32 %v456, %v464
    %v473 = vadd.f32 %v457, %v465
    %v474 = vadd.f32 %v458, %v466
    %v475 = vadd.f32 %v459, %v467
    %v476 = vadd.f32 %v460, %v468
    %477 = vst [vmem:[#allocation6] sm:$0xff] %v469
    %478 = vst [vmem:[#allocation6 + $0x8] sm:$0xff] %v470
    %479 = vst [vmem:[#allocation6 + $0x10] sm:$0xff] %v471
    %480 = vst [vmem:[#allocation6 + $0x18] sm:$0xff] %v472
    %481 = vst [vmem:[#allocation6 + $0x20] sm:$0xff] %v473
    %482 = vst [vmem:[#allocation6 + $0x28] sm:$0xff] %v474
    %483 = vst [vmem:[#allocation6 + $0x30] sm:$0xff] %v475
    %484 = vst [vmem:[#allocation6 + $0x38] sm:$0xff] %v476
    %s485 = scalar_lea.vmem [#allocation3], 64
    %v486 = vld [vmem:[%s485] sm:$0xff]
    %v487 = vld [vmem:[%s485 + $0x8] sm:$0xff]
    %v488 = vld [vmem:[%s485 + $0x10] sm:$0xff]
    %v489 = vld [vmem:[%s485 + $0x18] sm:$0xff]
    %v490 = vld [vmem:[%s485 + $0x20] sm:$0xff]
    %v491 = vld [vmem:[%s485 + $0x28] sm:$0xff]
    %v492 = vld [vmem:[%s485 + $0x30] sm:$0xff]
    %v493 = vld [vmem:[%s485 + $0x38] sm:$0xff]
    %494 = vmatpush.xpose.msra.mxu0 0.0
    %495 = vmatpush.xpose.msra.mxu0 0.0
    %496 = vmatpush.xpose.msra.mxu0 0.0
    %497 = vmatpush.xpose.msra.mxu0 0.0
    %498 = vmatpush.xpose.msra.mxu0 0.0
    %499 = vmatpush.xpose.msra.mxu0 0.0
    %500 = vmatpush.xpose.msra.mxu0 0.0
    %501 = vmatpush.xpose.msra.mxu0 0.0
    %502 = vmatpush.xpose.msra.mxu0 0.0
    %503 = vmatpush.xpose.msra.mxu0 0.0
    %504 = vmatpush.xpose.msra.mxu0 0.0
    %505 = vmatpush.xpose.msra.mxu0 0.0
    %506 = vmatpush.xpose.msra.mxu0 %v492
    %507 = vmatpush.xpose.msra.mxu0 %v490
    %508 = vmatpush.xpose.msra.mxu0 %v488
    %509 = vmatpush.xpose.msra.mxu0 %v486
    %510 = vmatmul.f32.gmra.mxu0 %v486
    %v511 = vpop.f32.mrf.mxu0
    %v512 = vadd.f32 0.0, %v511
    %513 = vmatmul.f32.gmra.mxu0 %v488
    %v514 = vpop.f32.mrf.mxu0
    %v515 = vadd.f32 0.0, %v514
    %516 = vmatmul.f32.gmra.mxu0 %v490
    %v517 = vpop.f32.mrf.mxu0
    %v518 = vadd.f32 0.0, %v517
    %519 = vmatmul.f32.gmra.mxu0 %v492
    %v520 = vpop.f32.mrf.mxu0
    %v521 = vadd.f32 0.0, %v520
    %522 = vdwg.mxu0
    %523 = vmatpush.xpose.msra.mxu0 0.0
    %524 = vmatpush.xpose.msra.mxu0 0.0
    %525 = vmatpush.xpose.msra.mxu0 0.0
    %526 = vmatpush.xpose.msra.mxu0 0.0
    %527 = vmatpush.xpose.msra.mxu0 0.0
    %528 = vmatpush.xpose.msra.mxu0 0.0
    %529 = vmatpush.xpose.msra.mxu0 0.0
    %530 = vmatpush.xpose.msra.mxu0 0.0
    %531 = vmatpush.xpose.msra.mxu0 0.0
    %532 = vmatpush.xpose.msra.mxu0 0.0
    %533 = vmatpush.xpose.msra.mxu0 0.0
    %534 = vmatpush.xpose.msra.mxu0 0.0
    %535 = vmatpush.xpose.msra.mxu0 %v493
    %536 = vmatpush.xpose.msra.mxu0 %v491
    %537 = vmatpush.xpose.msra.mxu0 %v489
    %538 = vmatpush.xpose.msra.mxu0 %v487
    %539 = vmatmul.f32.gmra.mxu0 %v487
    %v540 = vpop.f32.mrf.mxu0
    %v541 = vadd.f32 %v512, %v540
    %542 = vmatmul.f32.gmra.mxu0 %v489
    %v543 = vpop.f32.mrf.mxu0
    %v544 = vadd.f32 %v515, %v543
    %545 = vmatmul.f32.gmra.mxu0 %v491
    %v546 = vpop.f32.mrf.mxu0
    %v547 = vadd.f32 %v518, %v546
    %548 = vmatmul.f32.gmra.mxu0 %v493
    %v549 = vpop.f32.mrf.mxu0
    %v550 = vadd.f32 %v521, %v549
    %551 = vdwg.mxu0
    %v552 = vsel %vm121, %v541, inf
    %553 = vmin.xlane.f32.xlu0 %v552
    %v554 = vpop.xlane.xlu0 %553
    %v555 = vsel %vm121, %v544, inf
    %556 = vmin.xlane.f32.xlu0 %v555
    %v557 = vpop.xlane.xlu0 %556
    %v558 = vsel %vm121, %v547, inf
    %559 = vmin.xlane.f32.xlu0 %v558
    %v560 = vpop.xlane.xlu0 %559
    %v561 = vsel %vm121, %v550, inf
    %562 = vmin.xlane.f32.xlu0 %v561
    %v563 = vpop.xlane.xlu0 %562
    %v564 = vsub.f32 %v554, %v541
    %v565 = vsub.f32 %v557, %v544
    %v566 = vsub.f32 %v560, %v547
    %v567 = vsub.f32 %v563, %v550
    %v568 = vmul.f32 %v564, 1.442695
    %v569 = vpow.pop %v568
    %v570 = vmul.f32 %v565, 1.442695
    %v571 = vpow.pop %v570
    %v572 = vmul.f32 %v566, 1.442695
    %v573 = vpow.pop %v572
    %v574 = vmul.f32 %v567, 1.442695
    %v575 = vpow.pop %v574
    %v576 = vsel %vm121, %v569, 0.0
    %577 = vadd.xlane.f32.xlu0 %v576
    %v578 = vpop.xlane.xlu0 %577
    %v579 = vsel %vm121, %v571, 0.0
    %580 = vadd.xlane.f32.xlu0 %v579
    %v581 = vpop.xlane.xlu0 %580
    %v582 = vsel %vm121, %v573, 0.0
    %583 = vadd.xlane.f32.xlu0 %v582
    %v584 = vpop.xlane.xlu0 %583
    %v585 = vsel %vm121, %v575, 0.0
    %586 = vadd.xlane.f32.xlu0 %v585
    %v587 = vpop.xlane.xlu0 %586
    %v589 = vsel %vm121, %v569, 0
    %v592 = vsel %vm121, %v571, 0
    %v595 = vsel %vm121, %v573, 0
    %v598 = vsel %vm121, %v575, 0
    %600 = vmatpush.msra.mxu0 0.0
    %601 = vmatpush.msra.mxu0 0.0
    %602 = vmatpush.msra.mxu0 0.0
    %603 = vmatpush.msra.mxu0 0.0
    %604 = vmatpush.msra.mxu0 0.0
    %605 = vmatpush.msra.mxu0 0.0
    %606 = vmatpush.msra.mxu0 0.0
    %607 = vmatpush.msra.mxu0 0.0
    %608 = vmatpush.msra.mxu0 0.0
    %609 = vmatpush.msra.mxu0 0.0
    %610 = vmatpush.msra.mxu0 0.0
    %611 = vmatpush.msra.mxu0 0.0
    %612 = vmatpush.msra.mxu0 %v492
    %613 = vmatpush.msra.mxu0 %v490
    %614 = vmatpush.msra.mxu0 %v488
    %615 = vmatpush.msra.mxu0 %v486
    %616 = vmatmul.f32.gmra.mxu0 %v589
    %v617 = vpop.f32.mrf.mxu0
    %v618 = vadd.f32 0.0, %v617
    %619 = vmatmul.f32.gmra.mxu0 %v592
    %v620 = vpop.f32.mrf.mxu0
    %v621 = vadd.f32 0.0, %v620
    %622 = vmatmul.f32.gmra.mxu0 %v595
    %v623 = vpop.f32.mrf.mxu0
    %v624 = vadd.f32 0.0, %v623
    %625 = vmatmul.f32.gmra.mxu0 %v598
    %v626 = vpop.f32.mrf.mxu0
    %v627 = vadd.f32 0.0, %v626
    %628 = vdwg.mxu0
    %629 = vmatpush.msra.mxu0 0.0
    %630 = vmatpush.msra.mxu0 0.0
    %631 = vmatpush.msra.mxu0 0.0
    %632 = vmatpush.msra.mxu0 0.0
    %633 = vmatpush.msra.mxu0 0.0
    %634 = vmatpush.msra.mxu0 0.0
    %635 = vmatpush.msra.mxu0 0.0
    %636 = vmatpush.msra.mxu0 0.0
    %637 = vmatpush.msra.mxu0 0.0
    %638 = vmatpush.msra.mxu0 0.0
    %639 = vmatpush.msra.mxu0 0.0
    %640 = vmatpush.msra.mxu0 0.0
    %641 = vmatpush.msra.mxu0 %v493
    %642 = vmatpush.msra.mxu0 %v491
    %643 = vmatpush.msra.mxu0 %v489
    %644 = vmatpush.msra.mxu0 %v487
    %645 = vmatmul.f32.gmra.mxu0 %v589
    %v646 = vpop.f32.mrf.mxu0
    %v647 = vadd.f32 0.0, %v646
    %648 = vmatmul.f32.gmra.mxu0 %v592
    %v649 = vpop.f32.mrf.mxu0
    %v650 = vadd.f32 0.0, %v649
    %651 = vmatmul.f32.gmra.mxu0 %v595
    %v652 = vpop.f32.mrf.mxu0
    %v653 = vadd.f32 0.0, %v652
    %654 = vmatmul.f32.gmra.mxu0 %v598
    %v655 = vpop.f32.mrf.mxu0
    %v656 = vadd.f32 0.0, %v655
    %657 = vdwg.mxu0
    %v658 = vadd.f32 %v486, %v487
    %659 = vadd.xlane.f32.xlu0 %v658
    %v660 = vpop.xlane.xlu0 %659
    %v661 = vadd.f32 %v488, %v489
    %662 = vadd.xlane.f32.xlu0 %v661
    %v663 = vpop.xlane.xlu0 %662
    %v664 = vadd.f32 %v490, %v491
    %665 = vadd.xlane.f32.xlu0 %v664
    %v666 = vpop.xlane.xlu0 %665
    %v667 = vadd.f32 %v492, %v493
    %668 = vadd.xlane.f32.xlu0 %v667
    %v669 = vpop.xlane.xlu0 %668
    %v670 = vmul.f32 %v660, %v246
    %v671 = vmul.f32 %v663, %v246
    %v672 = vmul.f32 %v666, %v246
    %v673 = vmul.f32 %v669, %v246
    %v674 = vmul.f32 %v42, %v670
    %v675 = vmul.f32 %v43, %v671
    %v676 = vmul.f32 %v44, %v672
    %v677 = vmul.f32 %v45, %v673
    %v678 = vsel %vm255, %v674, 0.0
    %v679 = vsel %vm255, %v675, 0.0
    %v680 = vadd.f32 %v678, %v679
    %v681 = vsel %vm255, %v676, 0.0
    %v682 = vadd.f32 %v680, %v681
    %v683 = vsel %vm255, %v677, 0.0
    %v684 = vadd.f32 %v682, %v683
    %v685 = vrot.slane %v684, 4
    %v686 = vadd.f32 %v684, %v685
    %v687 = vrot.slane %v686, 2
    %v688 = vadd.f32 %v686, %v687
    %v689 = vrot.slane %v688, 1
    %v690 = vadd.f32 %v688, %v689
    %v691 = vadd.f32 %v690, %v46
    %v692 = vmax.f32 %v691, 0.0
    %v693 = vperm.slane %v692, 0
    %v694 = vmul.f32 %v47, %v693
    %v695 = vmul.f32 %v48, %v693
    %v696 = vmul.f32 %v49, %v693
    %v697 = vmul.f32 %v50, %v693
    %v698 = vsel %vm255, %v694, 0.0
    %699 = vadd.xlane.f32.xlu0 %v698
    %v700 = vpop.xlane.xlu0 %699
    %v701 = vsel %vm255, %v695, 0.0
    %702 = vadd.xlane.f32.xlu0 %v701
    %v703 = vpop.xlane.xlu0 %702
    %v704 = vsel %vm255, %v696, 0.0
    %705 = vadd.xlane.f32.xlu0 %v704
    %v706 = vpop.xlane.xlu0 %705
    %v707 = vsel %vm255, %v697, 0.0
    %708 = vadd.xlane.f32.xlu0 %v707
    %v709 = vpop.xlane.xlu0 %708
    %v710 = vadd.f32 %v700, %v51
    %v711 = vadd.f32 %v703, %v52
    %v712 = vadd.f32 %v706, %v53
    %v713 = vadd.f32 %v709, %v54
    %v714 = vxor.u32 %v710, 2147483648
    %v715 = vxor.u32 %v711, 2147483648
    %v716 = vxor.u32 %v712, 2147483648
    %v717 = vxor.u32 %v713, 2147483648
    %v718 = vmul.f32 %v714, 1.442695
    %v719 = vpow.pop %v718
    %v720 = vmul.f32 %v715, 1.442695
    %v721 = vpow.pop %v720
    %v722 = vmul.f32 %v716, 1.442695
    %v723 = vpow.pop %v722
    %v724 = vmul.f32 %v717, 1.442695
    %v725 = vpow.pop %v724
    %v726 = vadd.f32 %v719, 1.0
    %v727 = vadd.f32 %v721, 1.0
    %v728 = vadd.f32 %v723, 1.0
    %v729 = vadd.f32 %v725, 1.0
    %v730 = vrcp.pop %v726
    %v731 = vmul.f32 %v726, %v730
    %v732 = vsub.f32 1.0, %v731
    %v733 = vmul.f32 %v730, %v732
    %v734 = vadd.f32 %v730, %v733
    %vm735 = vweird.f32 %v726
    %vm736 = vweird.f32 %v730
    %vm737 = vmor %vm735, %vm736
    %v738 = vsel %vm737, %v730, %v734
    %v739 = vand.u32 2147483647, %v726
    %vm740 = vcmp.eq.f32.partialorder %v739, 8.507059e+37
    %v741 = vand.u32 %v726, 2147483648
    %v742 = vor.u32 1.1754944e-38, %v741
    %v743 = vsel %vm740, %v742, %v738
    %v744 = vmul.f32 1.0, %v743
    %v745 = vrcp.pop %v727
    %v746 = vmul.f32 %v727, %v745
    %v747 = vsub.f32 1.0, %v746
    %v748 = vmul.f32 %v745, %v747
    %v749 = vadd.f32 %v745, %v748
    %vm750 = vweird.f32 %v727
    %vm751 = vweird.f32 %v745
    %vm752 = vmor %vm750, %vm751
    %v753 = vsel %vm752, %v745, %v749
    %v754 = vand.u32 2147483647, %v727
    %vm755 = vcmp.eq.f32.partialorder %v754, 8.507059e+37
    %v756 = vand.u32 %v727, 2147483648
    %v757 = vor.u32 1.1754944e-38, %v756
    %v758 = vsel %vm755, %v757, %v753
    %v759 = vmul.f32 1.0, %v758
    %v760 = vrcp.pop %v728
    %v761 = vmul.f32 %v728, %v760
    %v762 = vsub.f32 1.0, %v761
    %v763 = vmul.f32 %v760, %v762
    %v764 = vadd.f32 %v760, %v763
    %vm765 = vweird.f32 %v728
    %vm766 = vweird.f32 %v760
    %vm767 = vmor %vm765, %vm766
    %v768 = vsel %vm767, %v760, %v764
    %v769 = vand.u32 2147483647, %v728
    %vm770 = vcmp.eq.f32.partialorder %v769, 8.507059e+37
    %v771 = vand.u32 %v728, 2147483648
    %v772 = vor.u32 1.1754944e-38, %v771
    %v773 = vsel %vm770, %v772, %v768
    %v774 = vmul.f32 1.0, %v773
    %v775 = vrcp.pop %v729
    %v776 = vmul.f32 %v729, %v775
    %v777 = vsub.f32 1.0, %v776
    %v778 = vmul.f32 %v775, %v777
    %v779 = vadd.f32 %v775, %v778
    %vm780 = vweird.f32 %v729
    %vm781 = vweird.f32 %v775
    %vm782 = vmor %vm780, %vm781
    %v783 = vsel %vm782, %v775, %v779
    %v784 = vand.u32 2147483647, %v729
    %vm785 = vcmp.eq.f32.partialorder %v784, 8.507059e+37
    %v786 = vand.u32 %v729, 2147483648
    %v787 = vor.u32 1.1754944e-38, %v786
    %v788 = vsel %vm785, %v787, %v783
    %v789 = vmul.f32 1.0, %v788
    %v790 = vrcp.pop %v578
    %v791 = vmul.f32 %v578, %v790
    %v792 = vsub.f32 1.0, %v791
    %v793 = vmul.f32 %v790, %v792
    %v794 = vadd.f32 %v790, %v793
    %vm795 = vweird.f32 %v578
    %vm796 = vweird.f32 %v790
    %vm797 = vmor %vm795, %vm796
    %v798 = vsel %vm797, %v790, %v794
    %v799 = vand.u32 2147483647, %v578
    %vm800 = vcmp.eq.f32.partialorder %v799, 8.507059e+37
    %v801 = vand.u32 %v578, 2147483648
    %v802 = vor.u32 1.1754944e-38, %v801
    %v803 = vsel %vm800, %v802, %v798
    %v804 = vrcp.pop %v581
    %v805 = vmul.f32 %v581, %v804
    %v806 = vsub.f32 1.0, %v805
    %v807 = vmul.f32 %v804, %v806
    %v808 = vadd.f32 %v804, %v807
    %vm809 = vweird.f32 %v581
    %vm810 = vweird.f32 %v804
    %vm811 = vmor %vm809, %vm810
    %v812 = vsel %vm811, %v804, %v808
    %v813 = vand.u32 2147483647, %v581
    %vm814 = vcmp.eq.f32.partialorder %v813, 8.507059e+37
    %v815 = vand.u32 %v581, 2147483648
    %v816 = vor.u32 1.1754944e-38, %v815
    %v817 = vsel %vm814, %v816, %v812
    %v818 = vrcp.pop %v584
    %v819 = vmul.f32 %v584, %v818
    %v820 = vsub.f32 1.0, %v819
    %v821 = vmul.f32 %v818, %v820
    %v822 = vadd.f32 %v818, %v821
    %vm823 = vweird.f32 %v584
    %vm824 = vweird.f32 %v818
    %vm825 = vmor %vm823, %vm824
    %v826 = vsel %vm825, %v818, %v822
    %v827 = vand.u32 2147483647, %v584
    %vm828 = vcmp.eq.f32.partialorder %v827, 8.507059e+37
    %v829 = vand.u32 %v584, 2147483648
    %v830 = vor.u32 1.1754944e-38, %v829
    %v831 = vsel %vm828, %v830, %v826
    %v832 = vrcp.pop %v587
    %v833 = vmul.f32 %v587, %v832
    %v834 = vsub.f32 1.0, %v833
    %v835 = vmul.f32 %v832, %v834
    %v836 = vadd.f32 %v832, %v835
    %vm837 = vweird.f32 %v587
    %vm838 = vweird.f32 %v832
    %vm839 = vmor %vm837, %vm838
    %v840 = vsel %vm839, %v832, %v836
    %v841 = vand.u32 2147483647, %v587
    %vm842 = vcmp.eq.f32.partialorder %v841, 8.507059e+37
    %v843 = vand.u32 %v587, 2147483648
    %v844 = vor.u32 1.1754944e-38, %v843
    %v845 = vsel %vm842, %v844, %v840
    %v846 = vmul.f32 %v424, %v803
    %v847 = vmul.f32 %v424, %v817
    %v848 = vmul.f32 %v424, %v831
    %v849 = vmul.f32 %v424, %v845
    %v850 = vadd.f32 %v744, 1.0
    %v851 = vadd.f32 %v759, 1.0
    %v852 = vadd.f32 %v774, 1.0
    %v853 = vadd.f32 %v789, 1.0
    %855 = vset.pattern.permute.xlu0 0
    %856 = vperm.xlu0 %855, %v850
    %v857 = vpop.permute.xlu0 %856
    %860 = vset.pattern.permute.xlu0 0
    %861 = vperm.xlu0 %860, %v851
    %v862 = vpop.permute.xlu0 %861
    %865 = vset.pattern.permute.xlu0 0
    %866 = vperm.xlu0 %865, %v852
    %v867 = vpop.permute.xlu0 %866
    %870 = vset.pattern.permute.xlu0 0
    %871 = vperm.xlu0 %870, %v853
    %v872 = vpop.permute.xlu0 %871
    %v874 = vmul.f32 %v486, %v857
    %v875 = vmul.f32 %v487, %v857
    %v876 = vmul.f32 %v488, %v862
    %v877 = vmul.f32 %v489, %v862
    %v878 = vmul.f32 %v490, %v867
    %v879 = vmul.f32 %v491, %v867
    %v880 = vmul.f32 %v492, %v872
    %v881 = vmul.f32 %v493, %v872
    %v882 = vmul.f32 %v618, %v846
    %v883 = vmul.f32 %v647, %v846
    %v884 = vmul.f32 %v621, %v847
    %v885 = vmul.f32 %v650, %v847
    %v886 = vmul.f32 %v624, %v848
    %v887 = vmul.f32 %v653, %v848
    %v888 = vmul.f32 %v627, %v849
    %v889 = vmul.f32 %v656, %v849
    %v890 = vadd.f32 %v874, %v882
    %v891 = vadd.f32 %v875, %v883
    %v892 = vadd.f32 %v876, %v884
    %v893 = vadd.f32 %v877, %v885
    %v894 = vadd.f32 %v878, %v886
    %v895 = vadd.f32 %v879, %v887
    %v896 = vadd.f32 %v880, %v888
    %v897 = vadd.f32 %v881, %v889
    %s898 = scalar_lea.vmem [#allocation6], 64
    %899 = vst [vmem:[%s898] sm:$0xff] %v890
    %900 = vst [vmem:[%s898 + $0x8] sm:$0xff] %v891
    %901 = vst [vmem:[%s898 + $0x10] sm:$0xff] %v892
    %902 = vst [vmem:[%s898 + $0x18] sm:$0xff] %v893
    %903 = vst [vmem:[%s898 + $0x20] sm:$0xff] %v894
    %904 = vst [vmem:[%s898 + $0x28] sm:$0xff] %v895
    %905 = vst [vmem:[%s898 + $0x30] sm:$0xff] %v896
    %906 = vst [vmem:[%s898 + $0x38] sm:$0xff] %v897
    // Predicated region
    $region30: #{tpu_custom_call.1} parent=1 // pred_check
      _
    $region31: #{tpu_custom_call.1} parent=1 // pred_check_branch
      %908 = sbr.rel (0) target = $region33
    $region32: #{tpu_custom_call.1} parent=1 // pred_region
      %910 = vsyncadd [#allocation5], 0
      %s911 = sshll.u32 [#allocation6], 4
      %s912 = int_to_ptr.vmem [resolvable:$true] %s911
      %s913 = sshll.u32 %s6, 4
      %s914 = int_to_ptr.hbm [resolvable:$true] %s913
      %919 = dma.vmem_to_hbm [thread:$0]  %s912, 2048, %s914, [#allocation5], 256, 256, 16
    $region33: #{tpu_custom_call.1} parent=1 // pred_fallthru
      _
    // Predicated region
    $region34: #{tpu_custom_call.1} parent=1 // pred_check
      _
    $region35: #{tpu_custom_call.1} parent=1 // pred_check_branch
      %921 = sbr.rel (0) target = $region37
    $region36: #{tpu_custom_call.1} parent=1 // pred_region
      %923 = dma.done [#allocation5], 2048
    $region37: #{tpu_custom_call.1} parent=1 // pred_fallthru
      _
    %924 = vsyncpa [#allocation4], 1
    %925 = vsyncpa [#allocation5], 1

</llo_original>
